<compile_context>
chip_gen: v7x
topology: tpu7x:2x2x1
jax: 0.10.0
libtpu: 0.0.40
codegen_flags: <defaults>
</compile_context>

<pallas_src>
import jax
import jax.numpy as jnp
from jax import lax
from jax.experimental import pallas as pl
from jax.experimental.pallas import tpu as pltpu

LANE = 128                     # lane width used for zero-padding small channel dims
H1, H2, H3 = 128, 64, 32


def _round_up(v, m):
    return ((v + m - 1) // m) * m


def _vmem_budget_bytes():
    """Generation-aware VMEM budget with headroom (~52MiB v7x, ~105MiB v5e/v6e)."""
    cap = 64 * 1024 * 1024                       # conservative default (v7x per-TC)
    try:
        info = pltpu.get_tpu_info()
        for attr in ("vmem_capacity_bytes", "vmem_size_bytes", "vmem_bytes"):
            v = getattr(info, attr, None)
            if v:
                cap = int(v)
                break
    except Exception:
        pass
    return int(cap * 0.82)


_VMEM_BUDGET = _vmem_budget_bytes()


# ----------------------------- Pallas kernels ------------------------------- #
def fused_gnn_kernel(a_ref, dinv_ref, x_ref, op_ref,
                     w1_ref, b1_ref, w2_ref, b2_ref, w3_ref, b3_ref,
                     wpe_ref, wfop_ref, bh_ref, out_ref):
    """All 3 GCN layers + folded projection/fc head; A read from HBM once.

    Normalization folded into row scalings:
        H_next = relu(dinv * (A_raw @ (dinv * (H @ W))) + b)
    """
    a = a_ref[...]                         # (N, N) bf16 raw (A + I), unnormalized
    dinv = dinv_ref[...]                   # (N, 1)  f32 D^-1/2 (0 on padded rows)

    def layer(h_bf16, w_ref, b_ref):
        z = jnp.dot(h_bf16, w_ref[...], preferred_element_type=jnp.float32)
        z = (dinv * z).astype(jnp.bfloat16)                       # column scale
        agg = jnp.dot(a, z, preferred_element_type=jnp.float32)   # MXU, f32 acc
        return jnp.maximum(dinv * agg + b_ref[...], 0.0)          # f32 VPU epilogue

    h1 = layer(x_ref[...], w1_ref, b1_ref)                        # (N, 128)
    h2 = layer(h1.astype(jnp.bfloat16), w2_ref, b2_ref)           # (N, 64)
    h3 = layer(h2.astype(jnp.bfloat16), w3_ref, b3_ref)           # (N, 32)

    out_ref[...] = (jnp.dot(h3.astype(jnp.bfloat16), wpe_ref[...],
                            preferred_element_type=jnp.float32)
                    + jnp.dot(op_ref[...], wfop_ref[...],
                              preferred_element_type=jnp.float32)
                    + bh_ref[...])


def gcn_blk_kernel(a_ref, dinv_ref, z_ref, b_ref, wnext_ref, znext_ref):
    """One GCN layer on a row block of raw A, fused with next layer's transform.

    z_ref rows are already scaled by dinv, so:
        H_blk    = relu(dinv_blk * (A_blk @ Z) + b)
        Znext_blk = dinv_blk * (H_blk @ Wnext)        (lane-dense, 128 wide)
    """
    agg = jnp.dot(a_ref[...], z_ref[...], preferred_element_type=jnp.float32)
    h = jnp.maximum(dinv_ref[...] * agg + b_ref[...], 0.0)
    znext_ref[...] = (dinv_ref[...] *
                      jnp.dot(h.astype(jnp.bfloat16), wnext_ref[...],
                              preferred_element_type=jnp.float32)
                      ).astype(znext_ref.dtype)


def gcn_head_blk_kernel(a_ref, dinv_ref, z_ref, op_ref, b_ref,
                        wpe_ref, wfop_ref, bh_ref, out_ref):
    """Layer 3 + (projection folded into) fc head, row-blocked variant."""
    agg = jnp.dot(a_ref[...], z_ref[...], preferred_element_type=jnp.float32)
    h3 = jnp.maximum(dinv_ref[...] * agg + b_ref[...], 0.0)
    out_ref[...] = (jnp.dot(h3.astype(jnp.bfloat16), wpe_ref[...],
                            preferred_element_type=jnp.float32)
                    + jnp.dot(op_ref[...], wfop_ref[...],
                              preferred_element_type=jnp.float32)
                    + bh_ref[...])


# ------------------------------- wrapper ------------------------------------ #
@jax.jit
def distance_weighted_gnn(x, edge_index, edge_attr, op, params):
    n, cin = x.shape
    opc = op.shape[1]
    out_ch = params["bf"].shape[-1]
    if cin > LANE or opc > LANE or out_ch > LANE:
        raise ValueError("in/op/out channel dims must be <= 128 (lane padding)")

    budget = _VMEM_BUDGET

    # ---- path selection (static shapes): fused if bf16 A fits in VMEM ------ #
    np_f = max(8, _round_up(n, 8))
    fused_need = (np_f * np_f * 2                       # A bf16 resident
                  + np_f * (2 * LANE * 2                # x, op bf16
                            + LANE * 4                  # out f32
                            + LANE * 4                  # dinv (lane-padded)
                            + 3 * LANE * 4)             # h1/h2/h3-class f32 temps
                  + (2 << 20))                          # weights + slack
    use_fused = fused_need <= budget

    if use_fused:
        np_ = np_f
    else:
        # Row-blocked fallback: derive the A row tile from the VMEM budget.
        resident_b = np_f * LANE * 2 + (1 << 20)        # single-buffered z + weights
        per_row = 2 * (np_f * 2) + 2 * LANE * 4 + 4 * LANE * 2
        tm = max(8, min(1024, (budget - resident_b) // per_row))
        tm -= tm % 8
        if tm >= 256:
            tm -= tm % 128
        np_ = _round_up(n, tm)

    # ---- raw adjacency (A + I) built once, at padded size, no norm pass ---- #
    edge_weight = (1.0 / (edge_attr + 1.0)).reshape(-1)
    src, dst = edge_index[0], edge_index[1]
    adj = jnp.zeros((np_, np_), jnp.float32)
    adj = adj.at[dst, src].add(edge_weight)
    node_idx = jnp.arange(n)
    adj = adj.at[node_idx, node_idx].add(1.0)           # self-loops, weight 1
    deg = adj.sum(axis=1)                                # padded rows -> 0
    dinv = jnp.where(deg > 0.0, lax.rsqrt(deg), 0.0).reshape(np_, 1)
    a_bf = adj.astype(jnp.bfloat16)                      # the only N^2 operand

    # ---- shared parameter prep (projection folded into fc) ----------------- #
    op_p = jnp.zeros((np_, LANE), jnp.float32).at[:n, :opc].set(op).astype(jnp.bfloat16)
    wpe = params["wp"] @ params["wf_emb"]                # (32, out_ch)
    bh = params["bp"] @ params["wf_emb"] + params["bf"]  # (1, out_ch)
    wfop_p = (jnp.zeros((LANE, LANE), jnp.float32)
              .at[:opc, :out_ch].set(params["wf_op"]).astype(jnp.bfloat16))
    bh_p = jnp.zeros((1, LANE), jnp.float32).at[:, :out_ch].set(bh)

    # ======================= fused single-kernel path ======================= #
    if use_fused:
        x_p = (jnp.zeros((np_, LANE), jnp.float32).at[:n, :cin].set(x)
               .astype(jnp.bfloat16))
        w1_p = (jnp.zeros((LANE, H1), jnp.float32).at[:cin, :].set(params["w1"])
                .astype(jnp.bfloat16))
        w2 = params["w2"].astype(jnp.bfloat16)           # (128, 64)
        w3 = params["w3"].astype(jnp.bfloat16)           # (64, 32)
        wpe_p = (jnp.zeros((H3, LANE), jnp.float32).at[:, :out_ch].set(wpe)
                 .astype(jnp.bfloat16))

        out_p = pl.pallas_call(
            fused_gnn_kernel,
            out_shape=jax.ShapeDtypeStruct((np_, LANE), jnp.float32),
            compiler_params=pltpu.CompilerParams(vmem_limit_bytes=budget),
            cost_estimate=pl.CostEstimate(
                flops=2 * np_ * np_ * (H1 + H2 + H3)
                      + 2 * np_ * (LANE * H1 + H1 * H2 + H2 * H3
                                   + H3 * LANE + LANE * LANE),
                transcendentals=0,
                bytes_accessed=2 * np_ * np_ + 8 * np_ * LANE + np_ * 4),
        )(a_bf, dinv, x_p, op_p,
          params["w1"].astype(jnp.bfloat16) if False else w1_p,  # keep order explicit
          params["b1"], w2, params["b2"], w3, params["b3"],
          wpe_p, wfop_p, bh_p)
        return out_p[:n, :out_ch]

    # ================== row-blocked fallback (A > VMEM budget) ============== #
    # Layer-1 transform is only O(N*C): do it in plain JAX, pre-scaled by dinv
    # and lane-dense, so all three pallas calls share the same aggregation form.
    z1 = jnp.zeros((np_, H1), jnp.float32).at[:n].set(x @ params["w1"])
    z1 = (dinv * z1).astype(jnp.bfloat16)                          # (np_, 128)

    # Lane-dense padded weights/biases so z2/z3 stores are unmasked 128-wide.
    w2_p = (jnp.zeros((H1, LANE), jnp.float32).at[:, :H2].set(params["w2"])
            .astype(jnp.bfloat16))
    w3_p = (jnp.zeros((LANE, LANE), jnp.float32).at[:H2, :H3].set(params["w3"])
            .astype(jnp.bfloat16))
    wpe_p = (jnp.zeros((LANE, LANE), jnp.float32).at[:H3, :out_ch].set(wpe)
             .astype(jnp.bfloat16))
    b1_p = params["b1"]                                            # (1, 128)
    b2_p = jnp.zeros((1, LANE), jnp.float32).at[:, :H2].set(params["b2"])
    b3_p = jnp.zeros((1, LANE), jnp.float32).at[:, :H3].set(params["b3"])

    grid = (np_ // tm,)
    cp = pltpu.CompilerParams(dimension_semantics=("parallel",),
                              vmem_limit_bytes=budget)

    def row_blk(c):                              # node-row-blocked, double-buffered
        return pl.BlockSpec((tm, c), lambda i: (i, 0))

    def resident(shape):                         # constant index -> single buffer
        return pl.BlockSpec(shape, lambda i: (0, 0), pipeline_mode=pl.Buffered(1))

    layer_cost = pl.CostEstimate(
        flops=2 * np_ * np_ * LANE + 2 * np_ * LANE * LANE,
        transcendentals=0,
        bytes_accessed=2 * np_ * np_ + 4 * np_ * LANE + 2 * LANE * LANE)

    def layer_call(z_in, b_p, w_next):
        return pl.pallas_call(
            gcn_blk_kernel,
            out_shape=jax.ShapeDtypeStruct((np_, LANE), jnp.bfloat16),
            grid=grid,
            in_specs=[row_blk(np_), row_blk(1), resident((np_, LANE)),
                      resident((1, LANE)), resident((LANE, LANE))],
            out_specs=row_blk(LANE),
            compiler_params=cp,
            cost_estimate=layer_cost,
        )(a_bf, dinv, z_in, b_p, w_next)

    z2 = layer_call(z1, b1_p, w2_p)              # layer 1 agg + layer-2 transform
    z3 = layer_call(z2, b2_p, w3_p)              # layer 2 agg + layer-3 transform

    out_p = pl.pallas_call(
        gcn_head_blk_kernel,
        out_shape=jax.ShapeDtypeStruct((np_, LANE), jnp.float32),
        grid=grid,
        in_specs=[row_blk(np_), row_blk(1), resident((np_, LANE)), row_blk(LANE),
                  resident((1, LANE)), resident((LANE, LANE)),
                  resident((LANE, LANE)), resident((1, LANE))],
        out_specs=row_blk(LANE),
        compiler_params=cp,
        cost_estimate=pl.CostEstimate(
            flops=2 * np_ * np_ * LANE + 4 * np_ * LANE * LANE,
            transcendentals=0,
            bytes_accessed=2 * np_ * np_ + 8 * np_ * LANE + 4 * LANE * LANE),
    )(a_bf, dinv, z3, op_p, b3_p, wpe_p, wfop_p, bh_p)

    return out_p[:n, :out_ch]


# ------------------------ deterministic parameters -------------------------- #
def init_params(key, in_channels, op_channels, out_channels):
    ks = jax.random.split(key, 10)

    def lin(kw, fan_in, fan_out):
        return jax.random.normal(kw, (fan_in, fan_out), jnp.float32) * 0.1

    params = {
        "w1": lin(ks[0], in_channels, H1),
        "b1": jax.random.normal(ks[1], (1, H1), jnp.float32) * 0.01,
        "w2": lin(ks[2], H1, H2),
        "b2": jax.random.normal(ks[3], (1, H2), jnp.float32) * 0.01,
        "w3": lin(ks[4], H2, H3),
        "b3": jax.random.normal(ks[5], (1, H3), jnp.float32) * 0.01,
        "wp": lin(ks[6], H3, in_channels),
        "bp": jax.random.normal(ks[7], (1, in_channels), jnp.float32) * 0.01,
    }
    wf = lin(ks[8], in_channels + op_channels, out_channels)
    params["wf_emb"] = wf[:in_channels]
    params["wf_op"] = wf[in_channels:]
    params["bf"] = jax.random.normal(ks[9], (1, out_channels), jnp.float32) * 0.01
    return params


# --------------------------------- main -------------------------------------- #
if __name__ == "__main__":
    N = 8            # nodes (a PyG "batch" of graphs is one block-diagonal graph)
    E = 16           # edges
    IN_CH = 4        # in_channels (node feature dim)
    OP_CH = 4        # op_channels
    OUT_CH = 3       # out_channels

    key = jax.random.PRNGKey(0)
    kx, ke, ka, kw, ko, kp = jax.random.split(key, 6)

    x = jax.random.normal(kx, (N, IN_CH), jnp.float32)
    # random edges with no self-loops (gcn_norm then adds weight-1 self-loops)
    src = jax.random.randint(ke, (E,), 0, N)
    off = jax.random.randint(ka, (E,), 1, N)
    dst = (src + off) % N
    edge_index = jnp.stack([src, dst], axis=0)                  # [2, E]
    edge_attr = jax.random.uniform(kw, (E, 1), jnp.float32)     # distances >= 0
    op = jax.random.normal(ko, (N, OP_CH), jnp.float32)

    params = init_params(kp, IN_CH, OP_CH, OUT_CH)

    out = distance_weighted_gnn(x, edge_index, edge_attr, op, params)
    jax.block_until_ready(out)
    assert out.shape == (N, OUT_CH)
    print("KERNEL_OK")
</pallas_src>

<mosaic_0001>
module attributes {stable_mosaic.version = 11 : i64} {
  func.func private @main(%arg0: i32) attributes {dimension_semantics = [#tpu.dimension_semantics<core_parallel>], iteration_bounds = array<i64: 2>, tpu.core_type = #tpu.core_type<sc_scalar_subcore>, window_params = []} {
    return
  }
}

module attributes {stable_mosaic.version = 11 : i64} {
  func.func private @main(%arg0: i32) attributes {dimension_semantics = [#tpu.dimension_semantics<core_parallel>], iteration_bounds = array<i64: 2>, tpu.core_type = #tpu.core_type<sc_scalar_subcore>, window_params = []} {
    return
  }
}

module attributes {stable_mosaic.version = 11 : i64} {
  func.func @fused_gnn_kernel(%arg0: memref<8x8xbf16, #tpu.memory_space<vmem>>, %arg1: memref<8x1xf32, #tpu.memory_space<vmem>>, %arg2: memref<8x128xbf16, #tpu.memory_space<vmem>>, %arg3: memref<8x128xbf16, #tpu.memory_space<vmem>>, %arg4: memref<128x128xbf16, #tpu.memory_space<vmem>>, %arg5: memref<1x128xf32, #tpu.memory_space<vmem>>, %arg6: memref<128x64xbf16, #tpu.memory_space<vmem>>, %arg7: memref<1x64xf32, #tpu.memory_space<vmem>>, %arg8: memref<64x32xbf16, #tpu.memory_space<vmem>>, %arg9: memref<1x32xf32, #tpu.memory_space<vmem>>, %arg10: memref<32x128xbf16, #tpu.memory_space<vmem>>, %arg11: memref<128x128xbf16, #tpu.memory_space<vmem>>, %arg12: memref<1x128xf32, #tpu.memory_space<vmem>>, %arg13: memref<8x128xf32, #tpu.memory_space<vmem>>) attributes {dimension_semantics = [], scalar_prefetch = 0 : i64, scratch_operands = 0 : i64, tpu.core_type = #tpu.core_type<tc>} {
    %c0 = arith.constant 0 : index
    %c0_0 = arith.constant 0 : index
    %0 = vector.load %arg0[%c0, %c0_0] : memref<8x8xbf16, #tpu.memory_space<vmem>>, vector<8x8xbf16>
    %c0_1 = arith.constant 0 : index
    %c0_2 = arith.constant 0 : index
    %1 = vector.load %arg1[%c0_1, %c0_2] : memref<8x1xf32, #tpu.memory_space<vmem>>, vector<8x1xf32>
    %c0_3 = arith.constant 0 : index
    %c0_4 = arith.constant 0 : index
    %2 = vector.load %arg2[%c0_3, %c0_4] : memref<8x128xbf16, #tpu.memory_space<vmem>>, vector<8x128xbf16>
    %c0_5 = arith.constant 0 : index
    %c0_6 = arith.constant 0 : index
    %3 = vector.load %arg4[%c0_5, %c0_6] : memref<128x128xbf16, #tpu.memory_space<vmem>>, vector<128x128xbf16>
    %cst = arith.constant dense<0.000000e+00> : vector<8x128xf32>
    %4 = tpu.matmul %2, %3, %cst {dimension_numbers = #tpu.dot_dimension_numbers<[1], [0], [0], [1], [0, 0, 1, 1], [], []>} : vector<8x128xbf16>, vector<128x128xbf16>, vector<8x128xf32> -> vector<8x128xf32>
    %5 = vector.broadcast %1 : vector<8x1xf32> to vector<8x128xf32>
    %6 = arith.mulf %5, %4 : vector<8x128xf32>
    %7 = arith.truncf %6 : vector<8x128xf32> to vector<8x128xbf16>
    %cst_7 = arith.constant dense<0.000000e+00> : vector<8x128xf32>
    %8 = tpu.matmul %0, %7, %cst_7 {dimension_numbers = #tpu.dot_dimension_numbers<[1], [0], [0], [1], [0, 0, 1, 1], [], []>} : vector<8x8xbf16>, vector<8x128xbf16>, vector<8x128xf32> -> vector<8x128xf32>
    %9 = vector.broadcast %1 : vector<8x1xf32> to vector<8x128xf32>
    %10 = arith.mulf %9, %8 : vector<8x128xf32>
    %c0_8 = arith.constant 0 : index
    %c0_9 = arith.constant 0 : index
    %11 = vector.load %arg5[%c0_8, %c0_9] : memref<1x128xf32, #tpu.memory_space<vmem>>, vector<1x128xf32>
    %12 = vector.broadcast %11 : vector<1x128xf32> to vector<8x128xf32>
    %13 = arith.addf %10, %12 : vector<8x128xf32>
    %cst_10 = arith.constant 0.000000e+00 : f32
    %14 = vector.broadcast %cst_10 : f32 to vector<8x128xf32>
    %15 = arith.maximumf %13, %14 : vector<8x128xf32>
    %16 = arith.truncf %15 : vector<8x128xf32> to vector<8x128xbf16>
    %c0_11 = arith.constant 0 : index
    %c0_12 = arith.constant 0 : index
    %17 = vector.load %arg6[%c0_11, %c0_12] : memref<128x64xbf16, #tpu.memory_space<vmem>>, vector<128x64xbf16>
    %cst_13 = arith.constant dense<0.000000e+00> : vector<8x64xf32>
    %18 = tpu.matmul %16, %17, %cst_13 {dimension_numbers = #tpu.dot_dimension_numbers<[1], [0], [0], [1], [0, 0, 1, 1], [], []>} : vector<8x128xbf16>, vector<128x64xbf16>, vector<8x64xf32> -> vector<8x64xf32>
    %19 = vector.broadcast %1 : vector<8x1xf32> to vector<8x64xf32>
    %20 = arith.mulf %19, %18 : vector<8x64xf32>
    %21 = arith.truncf %20 : vector<8x64xf32> to vector<8x64xbf16>
    %cst_14 = arith.constant dense<0.000000e+00> : vector<8x64xf32>
    %22 = tpu.matmul %0, %21, %cst_14 {dimension_numbers = #tpu.dot_dimension_numbers<[1], [0], [0], [1], [0, 0, 1, 1], [], []>} : vector<8x8xbf16>, vector<8x64xbf16>, vector<8x64xf32> -> vector<8x64xf32>
    %23 = vector.broadcast %1 : vector<8x1xf32> to vector<8x64xf32>
    %24 = arith.mulf %23, %22 : vector<8x64xf32>
    %c0_15 = arith.constant 0 : index
    %c0_16 = arith.constant 0 : index
    %25 = vector.load %arg7[%c0_15, %c0_16] : memref<1x64xf32, #tpu.memory_space<vmem>>, vector<1x64xf32>
    %26 = vector.broadcast %25 : vector<1x64xf32> to vector<8x64xf32>
    %27 = arith.addf %24, %26 : vector<8x64xf32>
    %cst_17 = arith.constant 0.000000e+00 : f32
    %28 = vector.broadcast %cst_17 : f32 to vector<8x64xf32>
    %29 = arith.maximumf %27, %28 : vector<8x64xf32>
    %30 = arith.truncf %29 : vector<8x64xf32> to vector<8x64xbf16>
    %c0_18 = arith.constant 0 : index
    %c0_19 = arith.constant 0 : index
    %31 = vector.load %arg8[%c0_18, %c0_19] : memref<64x32xbf16, #tpu.memory_space<vmem>>, vector<64x32xbf16>
    %cst_20 = arith.constant dense<0.000000e+00> : vector<8x32xf32>
    %32 = tpu.matmul %30, %31, %cst_20 {dimension_numbers = #tpu.dot_dimension_numbers<[1], [0], [0], [1], [0, 0, 1, 1], [], []>} : vector<8x64xbf16>, vector<64x32xbf16>, vector<8x32xf32> -> vector<8x32xf32>
    %33 = vector.broadcast %1 : vector<8x1xf32> to vector<8x32xf32>
    %34 = arith.mulf %33, %32 : vector<8x32xf32>
    %35 = arith.truncf %34 : vector<8x32xf32> to vector<8x32xbf16>
    %cst_21 = arith.constant dense<0.000000e+00> : vector<8x32xf32>
    %36 = tpu.matmul %0, %35, %cst_21 {dimension_numbers = #tpu.dot_dimension_numbers<[1], [0], [0], [1], [0, 0, 1, 1], [], []>} : vector<8x8xbf16>, vector<8x32xbf16>, vector<8x32xf32> -> vector<8x32xf32>
    %37 = vector.broadcast %1 : vector<8x1xf32> to vector<8x32xf32>
    %38 = arith.mulf %37, %36 : vector<8x32xf32>
    %c0_22 = arith.constant 0 : index
    %c0_23 = arith.constant 0 : index
    %39 = vector.load %arg9[%c0_22, %c0_23] : memref<1x32xf32, #tpu.memory_space<vmem>>, vector<1x32xf32>
    %40 = vector.broadcast %39 : vector<1x32xf32> to vector<8x32xf32>
    %41 = arith.addf %38, %40 : vector<8x32xf32>
    %cst_24 = arith.constant 0.000000e+00 : f32
    %42 = vector.broadcast %cst_24 : f32 to vector<8x32xf32>
    %43 = arith.maximumf %41, %42 : vector<8x32xf32>
    %44 = arith.truncf %43 : vector<8x32xf32> to vector<8x32xbf16>
    %c0_25 = arith.constant 0 : index
    %c0_26 = arith.constant 0 : index
    %45 = vector.load %arg10[%c0_25, %c0_26] : memref<32x128xbf16, #tpu.memory_space<vmem>>, vector<32x128xbf16>
    %cst_27 = arith.constant dense<0.000000e+00> : vector<8x128xf32>
    %46 = tpu.matmul %44, %45, %cst_27 {dimension_numbers = #tpu.dot_dimension_numbers<[1], [0], [0], [1], [0, 0, 1, 1], [], []>} : vector<8x32xbf16>, vector<32x128xbf16>, vector<8x128xf32> -> vector<8x128xf32>
    %c0_28 = arith.constant 0 : index
    %c0_29 = arith.constant 0 : index
    %47 = vector.load %arg3[%c0_28, %c0_29] : memref<8x128xbf16, #tpu.memory_space<vmem>>, vector<8x128xbf16>
    %c0_30 = arith.constant 0 : index
    %c0_31 = arith.constant 0 : index
    %48 = vector.load %arg11[%c0_30, %c0_31] : memref<128x128xbf16, #tpu.memory_space<vmem>>, vector<128x128xbf16>
    %cst_32 = arith.constant dense<0.000000e+00> : vector<8x128xf32>
    %49 = tpu.matmul %47, %48, %cst_32 {dimension_numbers = #tpu.dot_dimension_numbers<[1], [0], [0], [1], [0, 0, 1, 1], [], []>} : vector<8x128xbf16>, vector<128x128xbf16>, vector<8x128xf32> -> vector<8x128xf32>
    %50 = arith.addf %46, %49 : vector<8x128xf32>
    %c0_33 = arith.constant 0 : index
    %c0_34 = arith.constant 0 : index
    %51 = vector.load %arg12[%c0_33, %c0_34] : memref<1x128xf32, #tpu.memory_space<vmem>>, vector<1x128xf32>
    %52 = vector.broadcast %51 : vector<1x128xf32> to vector<8x128xf32>
    %53 = arith.addf %50, %52 : vector<8x128xf32>
    %c0_35 = arith.constant 0 : index
    %c0_36 = arith.constant 0 : index
    %54 = vector.load %arg13[%c0_35, %c0_36] : memref<8x128xf32, #tpu.memory_space<vmem>>, vector<8x128xf32>
    tpu.vector_store %arg13[%c0_35, %c0_36], %53 {strides = array<i32>} : memref<8x128xf32, #tpu.memory_space<vmem>>, vector<8x128xf32>,
    return
  }
}

</mosaic_0001>

<llo_original>
// kernel: distance_weighted_gnn.1
$region0: #{distance_weighted_gnn.1}
  #allocation0 [shape = 'u32[]', space=smem, size = 0x4, offset = 0x4, fixed_abs, tag = 'smem constant byte address 0x4 - core index']
  #allocation1 [shape = 'u32[144,128]{1,0:T(1,128)}', space=vmem, size = 0x12000, scoped, tag = 'internal scratch']
  %s0 = inlined_call_operand.vmem [shape: bf16[8,8], index: 0, kind: input, shape index: {}]
  %s1 = inlined_call_operand.vmem [shape: f32[8,1], index: 1, kind: input, shape index: {}]
  %s2 = inlined_call_operand.vmem [shape: bf16[8,128], index: 2, kind: input, shape index: {}]
  %s3 = inlined_call_operand.vmem [shape: bf16[8,128], index: 3, kind: input, shape index: {}]
  %s4 = inlined_call_operand.vmem [shape: bf16[128,128], index: 4, kind: input, shape index: {}]
  %s5 = inlined_call_operand.vmem [shape: f32[1,128], index: 5, kind: input, shape index: {}]
  %s6 = inlined_call_operand.vmem [shape: bf16[128,64], index: 6, kind: input, shape index: {}]
  %s7 = inlined_call_operand.vmem [shape: f32[1,64], index: 7, kind: input, shape index: {}]
  %s8 = inlined_call_operand.vmem [shape: bf16[64,32], index: 8, kind: input, shape index: {}]
  %s9 = inlined_call_operand.vmem [shape: f32[1,32], index: 9, kind: input, shape index: {}]
  %s10 = inlined_call_operand.vmem [shape: bf16[32,128], index: 10, kind: input, shape index: {}]
  %s11 = inlined_call_operand.vmem [shape: bf16[128,128], index: 11, kind: input, shape index: {}]
  %s12 = inlined_call_operand.vmem [shape: f32[1,128], index: 12, kind: input, shape index: {}]
  %s13 = inlined_call_operand.vmem [shape: f32[8,128], index: 13, kind: output, shape index: {}]
  %s14 = sld [smem:[#allocation0]]
  $region62: #{distance_weighted_gnn.1} parent=0
    _
  %s16 = ssub.s32 1, %s14
  %s17 = scalar_select 0, %s16, %s14
  // Predicated region
  $region2: #{distance_weighted_gnn.1} parent=0 // pred_check
    _
  $region3: #{distance_weighted_gnn.1} parent=0 // pred_check_branch
    %19 = sbr.rel (0) target = $region5
  $region4: #{distance_weighted_gnn.1} parent=0 // pred_region
    _
  $region5: #{distance_weighted_gnn.1} parent=0 // pred_fallthru
    _
  // Predicated region
  $region6: #{distance_weighted_gnn.1} parent=0 // pred_check
    _
  $region7: #{distance_weighted_gnn.1} parent=0 // pred_check_branch
    %21 = sbr.rel (0) target = $region9
  $region8: #{distance_weighted_gnn.1} parent=0 // pred_region
    _
  $region9: #{distance_weighted_gnn.1} parent=0 // pred_fallthru
    _
  // Predicated region
  $region10: #{distance_weighted_gnn.1} parent=0 // pred_check
    _
  $region11: #{distance_weighted_gnn.1} parent=0 // pred_check_branch
    %23 = sbr.rel (0) target = $region13
  $region12: #{distance_weighted_gnn.1} parent=0 // pred_region
    _
  $region13: #{distance_weighted_gnn.1} parent=0 // pred_fallthru
    _
  // Predicated region
  $region14: #{distance_weighted_gnn.1} parent=0 // pred_check
    _
  $region15: #{distance_weighted_gnn.1} parent=0 // pred_check_branch
    %25 = sbr.rel (0) target = $region17
  $region16: #{distance_weighted_gnn.1} parent=0 // pred_region
    _
  $region17: #{distance_weighted_gnn.1} parent=0 // pred_fallthru
    _
  // Predicated region
  $region18: #{distance_weighted_gnn.1} parent=0 // pred_check
    _
  $region19: #{distance_weighted_gnn.1} parent=0 // pred_check_branch
    %27 = sbr.rel (0) target = $region21
  $region20: #{distance_weighted_gnn.1} parent=0 // pred_region
    _
  $region21: #{distance_weighted_gnn.1} parent=0 // pred_fallthru
    _
  // Predicated region
  $region22: #{distance_weighted_gnn.1} parent=0 // pred_check
    _
  $region23: #{distance_weighted_gnn.1} parent=0 // pred_check_branch
    %29 = sbr.rel (0) target = $region25
  $region24: #{distance_weighted_gnn.1} parent=0 // pred_region
    _
  $region25: #{distance_weighted_gnn.1} parent=0 // pred_fallthru
    _
  // Predicated region
  $region26: #{distance_weighted_gnn.1} parent=0 // pred_check
    _
  $region27: #{distance_weighted_gnn.1} parent=0 // pred_check_branch
    %31 = sbr.rel (0) target = $region29
  $region28: #{distance_weighted_gnn.1} parent=0 // pred_region
    _
  $region29: #{distance_weighted_gnn.1} parent=0 // pred_fallthru
    _
  // Predicated region
  $region30: #{distance_weighted_gnn.1} parent=0 // pred_check
    _
  $region31: #{distance_weighted_gnn.1} parent=0 // pred_check_branch
    %33 = sbr.rel (0) target = $region33
  $region32: #{distance_weighted_gnn.1} parent=0 // pred_region
    _
  $region33: #{distance_weighted_gnn.1} parent=0 // pred_fallthru
    _
  // Predicated region
  $region34: #{distance_weighted_gnn.1} parent=0 // pred_check
    _
  $region35: #{distance_weighted_gnn.1} parent=0 // pred_check_branch
    %35 = sbr.rel (0) target = $region37
  $region36: #{distance_weighted_gnn.1} parent=0 // pred_region
    _
  $region37: #{distance_weighted_gnn.1} parent=0 // pred_fallthru
    _
  // Predicated region
  $region38: #{distance_weighted_gnn.1} parent=0 // pred_check
    _
  $region39: #{distance_weighted_gnn.1} parent=0 // pred_check_branch
    %37 = sbr.rel (0) target = $region41
  $region40: #{distance_weighted_gnn.1} parent=0 // pred_region
    _
  $region41: #{distance_weighted_gnn.1} parent=0 // pred_fallthru
    _
  // Predicated region
  $region42: #{distance_weighted_gnn.1} parent=0 // pred_check
    _
  $region43: #{distance_weighted_gnn.1} parent=0 // pred_check_branch
    %39 = sbr.rel (0) target = $region45
  $region44: #{distance_weighted_gnn.1} parent=0 // pred_region
    _
  $region45: #{distance_weighted_gnn.1} parent=0 // pred_fallthru
    _
  // Predicated region
  $region46: #{distance_weighted_gnn.1} parent=0 // pred_check
    _
  $region47: #{distance_weighted_gnn.1} parent=0 // pred_check_branch
    %41 = sbr.rel (0) target = $region49
  $region48: #{distance_weighted_gnn.1} parent=0 // pred_region
    _
  $region49: #{distance_weighted_gnn.1} parent=0 // pred_fallthru
    _
  // Predicated region
  $region50: #{distance_weighted_gnn.1} parent=0 // pred_check
    _
  $region51: #{distance_weighted_gnn.1} parent=0 // pred_check_branch
    %43 = sbr.rel (0) target = $region53
  $region52: #{distance_weighted_gnn.1} parent=0 // pred_region
    _
  $region53: #{distance_weighted_gnn.1} parent=0 // pred_fallthru
    _
  %v45 = vld [vmem:[%s0] sm:$0xf]
  %v46 = vld [vmem:[%s1] sm:$0xff]
  %v47 = vld [vmem:[%s2] sm:$0xf]
  %v48 = vld [vmem:[%s4] sm:$0xf]
  %v49 = vld [vmem:[%s4 + $0x4] sm:$0xf]
  %v50 = vld [vmem:[%s4 + $0x8] sm:$0xf]
  %v51 = vld [vmem:[%s4 + $0xc] sm:$0xf]
  %v52 = vld [vmem:[%s4 + $0x10] sm:$0xf]
  %v53 = vld [vmem:[%s4 + $0x14] sm:$0xf]
  %v54 = vld [vmem:[%s4 + $0x18] sm:$0xf]
  %v55 = vld [vmem:[%s4 + $0x1c] sm:$0xf]
  %v56 = vld [vmem:[%s4 + $0x20] sm:$0xf]
  %v57 = vld [vmem:[%s4 + $0x24] sm:$0xf]
  %v58 = vld [vmem:[%s4 + $0x28] sm:$0xf]
  %v59 = vld [vmem:[%s4 + $0x2c] sm:$0xf]
  %v60 = vld [vmem:[%s4 + $0x30] sm:$0xf]
  %v61 = vld [vmem:[%s4 + $0x34] sm:$0xf]
  %v62 = vld [vmem:[%s4 + $0x38] sm:$0xf]
  %v63 = vld [vmem:[%s4 + $0x3c] sm:$0xf]
  %v80 = vunpack.c.l.b16 %v48
  %v81 = vunpack.c.l.b16 %v49
  %v82 = vunpack.c.l.b16 %v50
  %v83 = vunpack.c.l.b16 %v51
  %v84 = vunpack.c.l.b16 %v52
  %v85 = vunpack.c.l.b16 %v53
  %v86 = vunpack.c.l.b16 %v54
  %v87 = vunpack.c.l.b16 %v55
  %v88 = vunpack.c.l.b16 %v56
  %v89 = vunpack.c.l.b16 %v57
  %v90 = vunpack.c.l.b16 %v58
  %v91 = vunpack.c.l.b16 %v59
  %v92 = vunpack.c.l.b16 %v60
  %v93 = vunpack.c.l.b16 %v61
  %v94 = vunpack.c.l.b16 %v62
  %v95 = vunpack.c.l.b16 %v63
  %v96 = vpack.c.b16 %v81, %v80
  %v97 = vpack.c.b16 %v83, %v82
  %v98 = vpack.c.b16 %v85, %v84
  %v99 = vpack.c.b16 %v87, %v86
  %v100 = vpack.c.b16 %v89, %v88
  %v101 = vpack.c.b16 %v91, %v90
  %v102 = vpack.c.b16 %v93, %v92
  %v103 = vpack.c.b16 %v95, %v94
  %112 = vmatprep.subr.bf16.mxu0 0
  %113 = vmatpush1.bf16.msra.mxu0 %v96
  %114 = vmatprep.subr.bf16.mxu0 0
  %115 = vmatpush1.bf16.msra.mxu0 %v97
  %116 = vmatprep.subr.bf16.mxu0 0
  %117 = vmatpush1.bf16.msra.mxu0 %v98
  %118 = vmatprep.subr.bf16.mxu0 0
  %119 = vmatpush1.bf16.msra.mxu0 %v99
  %120 = vmatprep.subr.bf16.mxu0 0
  %121 = vmatpush1.bf16.msra.mxu0 %v100
  %122 = vmatprep.subr.bf16.mxu0 0
  %123 = vmatpush1.bf16.msra.mxu0 %v101
  %124 = vmatprep.subr.bf16.mxu0 0
  %125 = vmatpush1.bf16.msra.mxu0 %v102
  %126 = vmatprep.subr.bf16.mxu0 0
  %127 = vmatpush1.bf16.msra.mxu0 %v103
  %128 = vmatprep.subr.bf16.mxu0 0
  %129 = vmatpush1.bf16.msra.mxu0 0
  %130 = vmatprep.subr.bf16.mxu0 0
  %131 = vmatpush1.bf16.msra.mxu0 0
  %132 = vmatprep.subr.bf16.mxu0 0
  %133 = vmatpush1.bf16.msra.mxu0 0
  %134 = vmatprep.subr.bf16.mxu0 0
  %135 = vmatpush1.bf16.msra.mxu0 0
  %136 = vmatprep.subr.bf16.mxu0 0
  %137 = vmatpush1.bf16.msra.mxu0 0
  %138 = vmatprep.subr.bf16.mxu0 0
  %139 = vmatpush1.bf16.msra.mxu0 0
  %140 = vmatprep.subr.bf16.mxu0 0
  %141 = vmatpush1.bf16.msra.mxu0 0
  %142 = vmatprep.subr.bf16.mxu0 0
  %143 = vmatpush1.bf16.msra.mxu0 0
  %144 = vmatprep.mubr.bf16.mxu0 0
  %145 = vmatmul.mubr.bf16.gmra.mrb[0].mxu0 %v47
  %v146 = vpop.f32.mrb[0].mxu0
  %v147 = vadd.f32 0.0, %v146
  %v148 = vpop.f32.mrb[0].mxu0
  %v149 = vpop.f32.mrb[0].mxu0
  %v150 = vpop.f32.mrb[0].mxu0
  %151 = vdwg.mxu0
  %153 = vset.pattern.permute.xlu0 0
  %154 = vperm.xlu0 %153, %v46
  %v155 = vpop.permute.xlu0 %154
  %v157 = vmul.f32 %v155, %v147
  %v158 = vpack.c.bf16 %v157, %v157
  %vm159 = vcmask 64512
  %v161 = vsel %vm159, %v45, 0
  %vm163 = vcmask 1043456
  %v165 = vsel %vm163, %v158, 0
  %167 = vmatprep.subr.bf16.mxu0 0
  %168 = vmatpush1.bf16.msra.mxu0 %v165
  %169 = vmatprep.subr.bf16.mxu0 0
  %170 = vmatpush1.bf16.msra.mxu0 0
  %171 = vmatprep.subr.bf16.mxu0 0
  %172 = vmatpush1.bf16.msra.mxu0 0
  %173 = vmatprep.subr.bf16.mxu0 0
  %174 = vmatpush1.bf16.msra.mxu0 0
  %175 = vmatprep.subr.bf16.mxu0 0
  %176 = vmatpush1.bf16.msra.mxu0 0
  %177 = vmatprep.subr.bf16.mxu0 0
  %178 = vmatpush1.bf16.msra.mxu0 0
  %179 = vmatprep.subr.bf16.mxu0 0
  %180 = vmatpush1.bf16.msra.mxu0 0
  %181 = vmatprep.subr.bf16.mxu0 0
  %182 = vmatpush1.bf16.msra.mxu0 0
  %183 = vmatprep.subr.bf16.mxu0 0
  %184 = vmatpush1.bf16.msra.mxu0 0
  %185 = vmatprep.subr.bf16.mxu0 0
  %186 = vmatpush1.bf16.msra.mxu0 0
  %187 = vmatprep.subr.bf16.mxu0 0
  %188 = vmatpush1.bf16.msra.mxu0 0
  %189 = vmatprep.subr.bf16.mxu0 0
  %190 = vmatpush1.bf16.msra.mxu0 0
  %191 = vmatprep.subr.bf16.mxu0 0
  %192 = vmatpush1.bf16.msra.mxu0 0
  %193 = vmatprep.subr.bf16.mxu0 0
  %194 = vmatpush1.bf16.msra.mxu0 0
  %195 = vmatprep.subr.bf16.mxu0 0
  %196 = vmatpush1.bf16.msra.mxu0 0
  %197 = vmatprep.subr.bf16.mxu0 0
  %198 = vmatpush1.bf16.msra.mxu0 0
  %199 = vmatprep.mubr.bf16.mxu0 0
  %200 = vmatmul.mubr.bf16.gmra.mrb[0].mxu0 %v161
  %v201 = vpop.f32.mrb[0].mxu0
  %v202 = vadd.f32 0.0, %v201
  %v203 = vpop.f32.mrb[0].mxu0
  %v204 = vpop.f32.mrb[0].mxu0
  %v205 = vpop.f32.mrb[0].mxu0
  %206 = vdwg.mxu0
  %v207 = vmul.f32 %v155, %v202
  %v208 = vld [vmem:[%s5] sm:$0x1]
  %v210 = vlaneseq
  %v211 = vshrl.u32 %v210, 7
  %v212 = vsub.s32 0, %v211
  %v213 = vrot.slane %v208, %v212
  %v215 = vadd.f32 %v207, %v213
  %v216 = vmax.f32 %v215, 0.0
  %v217 = vpack.c.bf16 %v216, %v216
  %v218 = vld [vmem:[%s6] sm:$0xf]
  %v219 = vld [vmem:[%s6 + $0x4] sm:$0xf]
  %v220 = vld [vmem:[%s6 + $0x8] sm:$0xf]
  %v221 = vld [vmem:[%s6 + $0xc] sm:$0xf]
  %v222 = vld [vmem:[%s6 + $0x10] sm:$0xf]
  %v223 = vld [vmem:[%s6 + $0x14] sm:$0xf]
  %v224 = vld [vmem:[%s6 + $0x18] sm:$0xf]
  %v225 = vld [vmem:[%s6 + $0x1c] sm:$0xf]
  %v226 = vld [vmem:[%s6 + $0x20] sm:$0xf]
  %v227 = vld [vmem:[%s6 + $0x24] sm:$0xf]
  %v228 = vld [vmem:[%s6 + $0x28] sm:$0xf]
  %v229 = vld [vmem:[%s6 + $0x2c] sm:$0xf]
  %v230 = vld [vmem:[%s6 + $0x30] sm:$0xf]
  %v231 = vld [vmem:[%s6 + $0x34] sm:$0xf]
  %v232 = vld [vmem:[%s6 + $0x38] sm:$0xf]
  %v233 = vld [vmem:[%s6 + $0x3c] sm:$0xf]
  %v250 = vunpack.c.l.b16 %v218
  %v251 = vunpack.c.l.b16 %v219
  %v252 = vunpack.c.l.b16 %v220
  %v253 = vunpack.c.l.b16 %v221
  %v254 = vunpack.c.l.b16 %v222
  %v255 = vunpack.c.l.b16 %v223
  %v256 = vunpack.c.l.b16 %v224
  %v257 = vunpack.c.l.b16 %v225
  %v258 = vunpack.c.l.b16 %v226
  %v259 = vunpack.c.l.b16 %v227
  %v260 = vunpack.c.l.b16 %v228
  %v261 = vunpack.c.l.b16 %v229
  %v262 = vunpack.c.l.b16 %v230
  %v263 = vunpack.c.l.b16 %v231
  %v264 = vunpack.c.l.b16 %v232
  %v265 = vunpack.c.l.b16 %v233
  %v266 = vpack.c.b16 %v251, %v250
  %v267 = vpack.c.b16 %v253, %v252
  %v268 = vpack.c.b16 %v255, %v254
  %v269 = vpack.c.b16 %v257, %v256
  %v270 = vpack.c.b16 %v259, %v258
  %v271 = vpack.c.b16 %v261, %v260
  %v272 = vpack.c.b16 %v263, %v262
  %v273 = vpack.c.b16 %v265, %v264
  %282 = vmatprep.subr.bf16.mxu0 0
  %283 = vmatpush1.bf16.msra.mxu0 %v266
  %284 = vmatprep.subr.bf16.mxu0 0
  %285 = vmatpush1.bf16.msra.mxu0 %v267
  %286 = vmatprep.subr.bf16.mxu0 0
  %287 = vmatpush1.bf16.msra.mxu0 %v268
  %288 = vmatprep.subr.bf16.mxu0 0
  %289 = vmatpush1.bf16.msra.mxu0 %v269
  %290 = vmatprep.subr.bf16.mxu0 0
  %291 = vmatpush1.bf16.msra.mxu0 %v270
  %292 = vmatprep.subr.bf16.mxu0 0
  %293 = vmatpush1.bf16.msra.mxu0 %v271
  %294 = vmatprep.subr.bf16.mxu0 0
  %295 = vmatpush1.bf16.msra.mxu0 %v272
  %296 = vmatprep.subr.bf16.mxu0 0
  %297 = vmatpush1.bf16.msra.mxu0 %v273
  %298 = vmatprep.subr.bf16.mxu0 0
  %299 = vmatpush1.bf16.msra.mxu0 0
  %300 = vmatprep.subr.bf16.mxu0 0
  %301 = vmatpush1.bf16.msra.mxu0 0
  %302 = vmatprep.subr.bf16.mxu0 0
  %303 = vmatpush1.bf16.msra.mxu0 0
  %304 = vmatprep.subr.bf16.mxu0 0
  %305 = vmatpush1.bf16.msra.mxu0 0
  %306 = vmatprep.subr.bf16.mxu0 0
  %307 = vmatpush1.bf16.msra.mxu0 0
  %308 = vmatprep.subr.bf16.mxu0 0
  %309 = vmatpush1.bf16.msra.mxu0 0
  %310 = vmatprep.subr.bf16.mxu0 0
  %311 = vmatpush1.bf16.msra.mxu0 0
  %312 = vmatprep.subr.bf16.mxu0 0
  %313 = vmatpush1.bf16.msra.mxu0 0
  %314 = vmatprep.mubr.bf16.mxu0 0
  %315 = vmatmul.mubr.bf16.gmra.mrb[0].mxu0 %v217
  %v316 = vpop.f32.mrb[0].mxu0
  %v317 = vadd.f32 0.0, %v316
  %v318 = vpop.f32.mrb[0].mxu0
  %v319 = vpop.f32.mrb[0].mxu0
  %v320 = vpop.f32.mrb[0].mxu0
  %321 = vdwg.mxu0
  %v322 = vmul.f32 %v155, %v317
  %v323 = vpack.c.bf16 %v322, %v322
  %v325 = vsel %vm163, %v323, 0
  %327 = vmatprep.subr.bf16.mxu0 0
  %328 = vmatpush1.bf16.msra.mxu0 %v325
  %329 = vmatprep.subr.bf16.mxu0 0
  %330 = vmatpush1.bf16.msra.mxu0 0
  %331 = vmatprep.subr.bf16.mxu0 0
  %332 = vmatpush1.bf16.msra.mxu0 0
  %333 = vmatprep.subr.bf16.mxu0 0
  %334 = vmatpush1.bf16.msra.mxu0 0
  %335 = vmatprep.subr.bf16.mxu0 0
  %336 = vmatpush1.bf16.msra.mxu0 0
  %337 = vmatprep.subr.bf16.mxu0 0
  %338 = vmatpush1.bf16.msra.mxu0 0
  %339 = vmatprep.subr.bf16.mxu0 0
  %340 = vmatpush1.bf16.msra.mxu0 0
  %341 = vmatprep.subr.bf16.mxu0 0
  %342 = vmatpush1.bf16.msra.mxu0 0
  %343 = vmatprep.subr.bf16.mxu0 0
  %344 = vmatpush1.bf16.msra.mxu0 0
  %345 = vmatprep.subr.bf16.mxu0 0
  %346 = vmatpush1.bf16.msra.mxu0 0
  %347 = vmatprep.subr.bf16.mxu0 0
  %348 = vmatpush1.bf16.msra.mxu0 0
  %349 = vmatprep.subr.bf16.mxu0 0
  %350 = vmatpush1.bf16.msra.mxu0 0
  %351 = vmatprep.subr.bf16.mxu0 0
  %352 = vmatpush1.bf16.msra.mxu0 0
  %353 = vmatprep.subr.bf16.mxu0 0
  %354 = vmatpush1.bf16.msra.mxu0 0
  %355 = vmatprep.subr.bf16.mxu0 0
  %356 = vmatpush1.bf16.msra.mxu0 0
  %357 = vmatprep.subr.bf16.mxu0 0
  %358 = vmatpush1.bf16.msra.mxu0 0
  %359 = vmatprep.mubr.bf16.mxu0 0
  %360 = vmatmul.mubr.bf16.gmra.mrb[0].mxu0 %v161
  %v361 = vpop.f32.mrb[0].mxu0
  %v362 = vadd.f32 0.0, %v361
  %v363 = vpop.f32.mrb[0].mxu0
  %v364 = vpop.f32.mrb[0].mxu0
  %v365 = vpop.f32.mrb[0].mxu0
  %366 = vdwg.mxu0
  %v367 = vmul.f32 %v155, %v362
  %v368 = vld [vmem:[%s7] sm:$0x1]
  %v370 = vlaneseq
  %v371 = vshrl.u32 %v370, 7
  %v372 = vsub.s32 0, %v371
  %v373 = vrot.slane %v368, %v372
  %v375 = vadd.f32 %v367, %v373
  %v376 = vmax.f32 %v375, 0.0
  %v377 = vpack.c.bf16 %v376, %v376
  %v378 = vld [vmem:[%s8] sm:$0xf]
  %v379 = vld [vmem:[%s8 + $0x4] sm:$0xf]
  %v380 = vld [vmem:[%s8 + $0x8] sm:$0xf]
  %v381 = vld [vmem:[%s8 + $0xc] sm:$0xf]
  %v382 = vld [vmem:[%s8 + $0x10] sm:$0xf]
  %v383 = vld [vmem:[%s8 + $0x14] sm:$0xf]
  %v384 = vld [vmem:[%s8 + $0x18] sm:$0xf]
  %v385 = vld [vmem:[%s8 + $0x1c] sm:$0xf]
  %v394 = vunpack.c.l.b16 %v378
  %v395 = vunpack.c.l.b16 %v379
  %v396 = vunpack.c.l.b16 %v380
  %v397 = vunpack.c.l.b16 %v381
  %v398 = vunpack.c.l.b16 %v382
  %v399 = vunpack.c.l.b16 %v383
  %v400 = vunpack.c.l.b16 %v384
  %v401 = vunpack.c.l.b16 %v385
  %v402 = vpack.c.b16 %v395, %v394
  %v403 = vpack.c.b16 %v397, %v396
  %v404 = vpack.c.b16 %v399, %v398
  %v405 = vpack.c.b16 %v401, %v400
  %vm410 = vcmask 523264
  %v412 = vsel %vm410, %v377, 0
  %414 = vmatprep.subr.bf16.mxu0 0
  %415 = vmatpush1.bf16.msra.mxu0 %v402
  %416 = vmatprep.subr.bf16.mxu0 0
  %417 = vmatpush1.bf16.msra.mxu0 %v403
  %418 = vmatprep.subr.bf16.mxu0 0
  %419 = vmatpush1.bf16.msra.mxu0 %v404
  %420 = vmatprep.subr.bf16.mxu0 0
  %421 = vmatpush1.bf16.msra.mxu0 %v405
  %422 = vmatprep.subr.bf16.mxu0 0
  %423 = vmatpush1.bf16.msra.mxu0 0
  %424 = vmatprep.subr.bf16.mxu0 0
  %425 = vmatpush1.bf16.msra.mxu0 0
  %426 = vmatprep.subr.bf16.mxu0 0
  %427 = vmatpush1.bf16.msra.mxu0 0
  %428 = vmatprep.subr.bf16.mxu0 0
  %429 = vmatpush1.bf16.msra.mxu0 0
  %430 = vmatprep.subr.bf16.mxu0 0
  %431 = vmatpush1.bf16.msra.mxu0 0
  %432 = vmatprep.subr.bf16.mxu0 0
  %433 = vmatpush1.bf16.msra.mxu0 0
  %434 = vmatprep.subr.bf16.mxu0 0
  %435 = vmatpush1.bf16.msra.mxu0 0
  %436 = vmatprep.subr.bf16.mxu0 0
  %437 = vmatpush1.bf16.msra.mxu0 0
  %438 = vmatprep.subr.bf16.mxu0 0
  %439 = vmatpush1.bf16.msra.mxu0 0
  %440 = vmatprep.subr.bf16.mxu0 0
  %441 = vmatpush1.bf16.msra.mxu0 0
  %442 = vmatprep.subr.bf16.mxu0 0
  %443 = vmatpush1.bf16.msra.mxu0 0
  %444 = vmatprep.subr.bf16.mxu0 0
  %445 = vmatpush1.bf16.msra.mxu0 0
  %446 = vmatprep.mubr.bf16.mxu0 0
  %447 = vmatmul.mubr.bf16.gmra.mrb[0].mxu0 %v412
  %v448 = vpop.f32.mrb[0].mxu0
  %v449 = vadd.f32 0.0, %v448
  %v450 = vpop.f32.mrb[0].mxu0
  %v451 = vpop.f32.mrb[0].mxu0
  %v452 = vpop.f32.mrb[0].mxu0
  %453 = vdwg.mxu0
  %v454 = vmul.f32 %v155, %v449
  %v455 = vpack.c.bf16 %v454, %v454
  %v457 = vsel %vm163, %v455, 0
  %459 = vmatprep.subr.bf16.mxu0 0
  %460 = vmatpush1.bf16.msra.mxu0 %v457
  %461 = vmatprep.subr.bf16.mxu0 0
  %462 = vmatpush1.bf16.msra.mxu0 0
  %463 = vmatprep.subr.bf16.mxu0 0
  %464 = vmatpush1.bf16.msra.mxu0 0
  %465 = vmatprep.subr.bf16.mxu0 0
  %466 = vmatpush1.bf16.msra.mxu0 0
  %467 = vmatprep.subr.bf16.mxu0 0
  %468 = vmatpush1.bf16.msra.mxu0 0
  %469 = vmatprep.subr.bf16.mxu0 0
  %470 = vmatpush1.bf16.msra.mxu0 0
  %471 = vmatprep.subr.bf16.mxu0 0
  %472 = vmatpush1.bf16.msra.mxu0 0
  %473 = vmatprep.subr.bf16.mxu0 0
  %474 = vmatpush1.bf16.msra.mxu0 0
  %475 = vmatprep.subr.bf16.mxu0 0
  %476 = vmatpush1.bf16.msra.mxu0 0
  %477 = vmatprep.subr.bf16.mxu0 0
  %478 = vmatpush1.bf16.msra.mxu0 0
  %479 = vmatprep.subr.bf16.mxu0 0
  %480 = vmatpush1.bf16.msra.mxu0 0
  %481 = vmatprep.subr.bf16.mxu0 0
  %482 = vmatpush1.bf16.msra.mxu0 0
  %483 = vmatprep.subr.bf16.mxu0 0
  %484 = vmatpush1.bf16.msra.mxu0 0
  %485 = vmatprep.subr.bf16.mxu0 0
  %486 = vmatpush1.bf16.msra.mxu0 0
  %487 = vmatprep.subr.bf16.mxu0 0
  %488 = vmatpush1.bf16.msra.mxu0 0
  %489 = vmatprep.subr.bf16.mxu0 0
  %490 = vmatpush1.bf16.msra.mxu0 0
  %491 = vmatprep.mubr.bf16.mxu0 0
  %492 = vmatmul.mubr.bf16.gmra.mrb[0].mxu0 %v161
  %v493 = vpop.f32.mrb[0].mxu0
  %v494 = vadd.f32 0.0, %v493
  %v495 = vpop.f32.mrb[0].mxu0
  %v496 = vpop.f32.mrb[0].mxu0
  %v497 = vpop.f32.mrb[0].mxu0
  %498 = vdwg.mxu0
  %v499 = vmul.f32 %v155, %v494
  %v500 = vld [vmem:[%s9] sm:$0x1]
  %v502 = vlaneseq
  %v503 = vshrl.u32 %v502, 7
  %v504 = vsub.s32 0, %v503
  %v505 = vrot.slane %v500, %v504
  %v507 = vadd.f32 %v499, %v505
  %v508 = vmax.f32 %v507, 0.0
  %v509 = vpack.c.bf16 %v508, %v508
  %v510 = vld [vmem:[%s10] sm:$0xf]
  %v511 = vld [vmem:[%s10 + $0x4] sm:$0xf]
  %v512 = vld [vmem:[%s10 + $0x8] sm:$0xf]
  %v513 = vld [vmem:[%s10 + $0xc] sm:$0xf]
  %v514 = vld [vmem:[%s3] sm:$0xf]
  %v515 = vld [vmem:[%s11] sm:$0xf]
  %v516 = vld [vmem:[%s11 + $0x4] sm:$0xf]
  %v517 = vld [vmem:[%s11 + $0x8] sm:$0xf]
  %v518 = vld [vmem:[%s11 + $0xc] sm:$0xf]
  %v519 = vld [vmem:[%s11 + $0x10] sm:$0xf]
  %v520 = vld [vmem:[%s11 + $0x14] sm:$0xf]
  %v521 = vld [vmem:[%s11 + $0x18] sm:$0xf]
  %v522 = vld [vmem:[%s11 + $0x1c] sm:$0xf]
  %v523 = vld [vmem:[%s11 + $0x20] sm:$0xf]
  %v524 = vld [vmem:[%s11 + $0x24] sm:$0xf]
  %v525 = vld [vmem:[%s11 + $0x28] sm:$0xf]
  %v526 = vld [vmem:[%s11 + $0x2c] sm:$0xf]
  %v527 = vld [vmem:[%s11 + $0x30] sm:$0xf]
  %v528 = vld [vmem:[%s11 + $0x34] sm:$0xf]
  %v529 = vld [vmem:[%s11 + $0x38] sm:$0xf]
  %v530 = vld [vmem:[%s11 + $0x3c] sm:$0xf]
  %v547 = vunpack.c.l.b16 %v515
  %v548 = vunpack.c.l.b16 %v516
  %v549 = vunpack.c.l.b16 %v517
  %v550 = vunpack.c.l.b16 %v518
  %v551 = vunpack.c.l.b16 %v519
  %v552 = vunpack.c.l.b16 %v520
  %v553 = vunpack.c.l.b16 %v521
  %v554 = vunpack.c.l.b16 %v522
  %v555 = vunpack.c.l.b16 %v523
  %v556 = vunpack.c.l.b16 %v524
  %v557 = vunpack.c.l.b16 %v525
  %v558 = vunpack.c.l.b16 %v526
  %v559 = vunpack.c.l.b16 %v527
  %v560 = vunpack.c.l.b16 %v528
  %v561 = vunpack.c.l.b16 %v529
  %v562 = vunpack.c.l.b16 %v530
  %v563 = vpack.c.b16 %v548, %v547
  %v564 = vpack.c.b16 %v550, %v549
  %v565 = vpack.c.b16 %v552, %v551
  %v566 = vpack.c.b16 %v554, %v553
  %v567 = vpack.c.b16 %v556, %v555
  %v568 = vpack.c.b16 %v558, %v557
  %v569 = vpack.c.b16 %v560, %v559
  %v570 = vpack.c.b16 %v562, %v561
  %579 = vmatprep.subr.bf16.mxu0 0
  %580 = vmatpush1.bf16.msra.mxu0 %v563
  %581 = vmatprep.subr.bf16.mxu0 0
  %582 = vmatpush1.bf16.msra.mxu0 %v564
  %583 = vmatprep.subr.bf16.mxu0 0
  %584 = vmatpush1.bf16.msra.mxu0 %v565
  %585 = vmatprep.subr.bf16.mxu0 0
  %586 = vmatpush1.bf16.msra.mxu0 %v566
  %587 = vmatprep.subr.bf16.mxu0 0
  %588 = vmatpush1.bf16.msra.mxu0 %v567
  %589 = vmatprep.subr.bf16.mxu0 0
  %590 = vmatpush1.bf16.msra.mxu0 %v568
  %591 = vmatprep.subr.bf16.mxu0 0
  %592 = vmatpush1.bf16.msra.mxu0 %v569
  %593 = vmatprep.subr.bf16.mxu0 0
  %594 = vmatpush1.bf16.msra.mxu0 %v570
  %595 = vmatprep.subr.bf16.mxu0 0
  %596 = vmatpush1.bf16.msra.mxu0 0
  %597 = vmatprep.subr.bf16.mxu0 0
  %598 = vmatpush1.bf16.msra.mxu0 0
  %599 = vmatprep.subr.bf16.mxu0 0
  %600 = vmatpush1.bf16.msra.mxu0 0
  %601 = vmatprep.subr.bf16.mxu0 0
  %602 = vmatpush1.bf16.msra.mxu0 0
  %603 = vmatprep.subr.bf16.mxu0 0
  %604 = vmatpush1.bf16.msra.mxu0 0
  %605 = vmatprep.subr.bf16.mxu0 0
  %606 = vmatpush1.bf16.msra.mxu0 0
  %607 = vmatprep.subr.bf16.mxu0 0
  %608 = vmatpush1.bf16.msra.mxu0 0
  %609 = vmatprep.subr.bf16.mxu0 0
  %610 = vmatpush1.bf16.msra.mxu0 0
  %611 = vmatprep.mubr.bf16.mxu0 0
  %612 = vmatmul.mubr.bf16.gmra.mrb[0].mxu0 %v514
  %v613 = vpop.f32.mrb[0].mxu0
  %v614 = vadd.f32 0.0, %v613
  %v615 = vpop.f32.mrb[0].mxu0
  %v616 = vpop.f32.mrb[0].mxu0
  %v617 = vpop.f32.mrb[0].mxu0
  %618 = vdwg.mxu0
  %v623 = vunpack.c.l.b16 %v510
  %v624 = vunpack.c.l.b16 %v511
  %v625 = vunpack.c.l.b16 %v512
  %v626 = vunpack.c.l.b16 %v513
  %v627 = vpack.c.b16 %v624, %v623
  %v628 = vpack.c.b16 %v626, %v625
  %vm631 = vcmask 261120
  %v633 = vsel %vm631, %v509, 0
  %635 = vmatprep.subr.bf16.mxu0 0
  %636 = vmatpush1.bf16.msra.mxu0 %v627
  %637 = vmatprep.subr.bf16.mxu0 0
  %638 = vmatpush1.bf16.msra.mxu0 %v628
  %639 = vmatprep.subr.bf16.mxu0 0
  %640 = vmatpush1.bf16.msra.mxu0 0
  %641 = vmatprep.subr.bf16.mxu0 0
  %642 = vmatpush1.bf16.msra.mxu0 0
  %643 = vmatprep.subr.bf16.mxu0 0
  %644 = vmatpush1.bf16.msra.mxu0 0
  %645 = vmatprep.subr.bf16.mxu0 0
  %646 = vmatpush1.bf16.msra.mxu0 0
  %647 = vmatprep.subr.bf16.mxu0 0
  %648 = vmatpush1.bf16.msra.mxu0 0
  %649 = vmatprep.subr.bf16.mxu0 0
  %650 = vmatpush1.bf16.msra.mxu0 0
  %651 = vmatprep.subr.bf16.mxu0 0
  %652 = vmatpush1.bf16.msra.mxu0 0
  %653 = vmatprep.subr.bf16.mxu0 0
  %654 = vmatpush1.bf16.msra.mxu0 0
  %655 = vmatprep.subr.bf16.mxu0 0
  %656 = vmatpush1.bf16.msra.mxu0 0
  %657 = vmatprep.subr.bf16.mxu0 0
  %658 = vmatpush1.bf16.msra.mxu0 0
  %659 = vmatprep.subr.bf16.mxu0 0
  %660 = vmatpush1.bf16.msra.mxu0 0
  %661 = vmatprep.subr.bf16.mxu0 0
  %662 = vmatpush1.bf16.msra.mxu0 0
  %663 = vmatprep.subr.bf16.mxu0 0
  %664 = vmatpush1.bf16.msra.mxu0 0
  %665 = vmatprep.subr.bf16.mxu0 0
  %666 = vmatpush1.bf16.msra.mxu0 0
  %667 = vmatprep.mubr.bf16.mxu0 0
  %668 = vmatmul.mubr.bf16.gmra.mrb[0].mxu0 %v633
  %v669 = vpop.f32.mrb[0].mxu0
  %v670 = vadd.f32 %v614, %v669
  %v671 = vpop.f32.mrb[0].mxu0
  %v672 = vpop.f32.mrb[0].mxu0
  %v673 = vpop.f32.mrb[0].mxu0
  %674 = vdwg.mxu0
  %v675 = vld [vmem:[%s12] sm:$0x1]
  %v677 = vlaneseq
  %v678 = vshrl.u32 %v677, 7
  %v679 = vsub.s32 0, %v678
  %v680 = vrot.slane %v675, %v679
  %v682 = vadd.f32 %v670, %v680
  %683 = vst [vmem:[%s13] sm:$0xff] %v682
  // Predicated region
  $region54: #{distance_weighted_gnn.1} parent=0 // pred_check
    _
  $region55: #{distance_weighted_gnn.1} parent=0 // pred_check_branch
    %685 = sbr.rel (0) target = $region57
  $region56: #{distance_weighted_gnn.1} parent=0 // pred_region
    _
  $region57: #{distance_weighted_gnn.1} parent=0 // pred_fallthru
    _
  // Predicated region
  $region58: #{distance_weighted_gnn.1} parent=0 // pred_check
    _
  $region59: #{distance_weighted_gnn.1} parent=0 // pred_check_branch
    %687 = sbr.rel (0) target = $region61
  $region60: #{distance_weighted_gnn.1} parent=0 // pred_region
    _
  $region61: #{distance_weighted_gnn.1} parent=0 // pred_fallthru
    _

</llo_original>
